<compile_context>
chip_gen: v6e
topology: v6e:2x2x1
jax: 0.10.0
libtpu: 0.0.40
codegen_flags: <defaults>
</compile_context>

<pallas_src>
import functools
import math

import jax
import jax.numpy as jnp
from jax.experimental import pallas as pl
from jax.experimental.pallas import tpu as pltpu


def _gelu_tanh(x):
    # TODO(synk): PyTorch nn.GELU() defaults to the exact erf form; the tanh
    # approximation is used here (guaranteed Mosaic lowering, |err| ~ 1e-3).
    c = 0.7978845608028654  # sqrt(2/pi)
    return 0.5 * x * (1.0 + jnp.tanh(c * (x + 0.044715 * (x * x * x))))


@functools.lru_cache(maxsize=None)
def _roll_matches_numpy() -> bool:
    """True iff pltpu.roll follows jnp.roll semantics: out[i] = x[(i - shift) % n].

    Tiny one-off probe kernel so the tap-shift sign is provably correct on the
    installed JAX/Mosaic version.
    """
    def k(x_ref, o_ref):
        o_ref[...] = pltpu.roll(x_ref[...], 1, axis=1)

    x = jax.lax.broadcasted_iota(jnp.float32, (8, 128), 1)
    out = pl.pallas_call(k, out_shape=jax.ShapeDtypeStruct((8, 128), jnp.float32))(x)
    return bool(out[0, 0] == 127.0)


def _vmem_capacity_bytes() -> int:
    try:
        return int(pltpu.get_tpu_info().vmem_capacity_bytes)  # 128 MiB v5e/v6e, 64 MiB v7x
    except Exception:  # pragma: no cover - conservative fallback
        return 64 << 20


# -----------------------------------------------------------------------------
# Fused kernel: DWConv7x7 + LayerNorm(C) + FiLM + 1x1 MLP (GELU) + residual.
# All arrays are viewed with the flattened spatial axis (H*W, lane-dense) last.
# -----------------------------------------------------------------------------
def _fused_kernel(x_ref, row_ref, col_ref, dww_ref, dwb_ref, g_ref, be_ref,
                  w1_ref, b1_ref, w2_ref, b2_ref, o_ref, *,
                  H, W, eps, roll_is_numpy):
    # x_ref/o_ref : (1, C, HWp)   input (residual + conv source) / output
    # row/col    : (1, HWp) int32 spatial row / column index per flat position
    # dww_ref    : (C, 49)        depthwise taps, dwb_ref: (C, 1) bias
    # g_ref/be_ref : (1, C, 1)    FiLM gamma / beta for this batch element
    # w1_ref:(Dh,C) bf16  b1_ref:(Dh,1) f32  w2_ref:(C,Dh) bf16  b2_ref:(C,1) f32
    C, HWp = x_ref.shape[1], x_ref.shape[2]
    x = x_ref[0].astype(jnp.float32)                 # (C, HWp)
    row = row_ref[...]                               # (1, HWp) int32
    col = col_ref[...]
    w_all = dww_ref[...].astype(jnp.float32)         # (C, 49)

    # Border-validity masks for the 7 row offsets and 7 column offsets.
    rmask = [jnp.logical_and(row + d >= 0, row + d < H) for d in range(-3, 4)]
    cmask = [jnp.logical_and(col + d >= 0, col + d < W) for d in range(-3, 4)]

    # Depthwise 7x7: each tap = static lane rotation (XLU, co-issues with the
    # VPU MAC) + masked multiply-add.  No spatial reslicing, no padded copy.
    acc = jnp.zeros((C, HWp), jnp.float32)
    for ky in range(7):
        dy = ky - 3
        for kx in range(7):
            dx = kx - 3
            s = dy * W + dx                          # want shifted[p] = x[p + s]
            sh = (-s) % HWp if roll_is_numpy else s % HWp
            shifted = pltpu.roll(x, sh, axis=1) if sh else x
            valid = jnp.logical_and(rmask[ky], cmask[kx])
            tap = jnp.where(valid, shifted, 0.0)
            acc = acc + tap * w_all[:, ky * 7 + kx: ky * 7 + kx + 1]
    y = acc + dwb_ref[...].astype(jnp.float32)       # (C, HWp)

    # LayerNorm over channels (sublane reduce), two-pass for accuracy.
    mean = jnp.mean(y, axis=0, keepdims=True)        # (1, HWp)
    yc = y - mean
    var = jnp.mean(yc * yc, axis=0, keepdims=True)
    yn = yc * jax.lax.rsqrt(var + eps)

    # FiLM modulation (gamma/beta computed once per batch element in XLA).
    h = yn * g_ref[0].astype(jnp.float32) + be_ref[0].astype(jnp.float32)

    # Pointwise MLP on the MXU: explicit bf16 operands, f32 accumulation.
    h1 = jnp.dot(w1_ref[...], h.astype(jnp.bfloat16),
                 preferred_element_type=jnp.float32) + b1_ref[...]
    h1 = _gelu_tanh(h1)
    h2 = jnp.dot(w2_ref[...], h1.astype(jnp.bfloat16),
                 preferred_element_type=jnp.float32) + b2_ref[...]

    # Residual add; cast on store (bf16 I/O works by just changing dtypes).
    o_ref[0] = (x + h2).astype(o_ref.dtype)


def convnext_film_block(x, t, p, *, eps=1e-6):
    """out = x + PW2(GELU(PW1(gamma(t) * LN_C(DWConv7x7(x)) + beta(t))))."""
    B, C, H, W = x.shape
    HW = H * W
    Dh = p["w1"].shape[0]
    HWp = ((HW + 127) // 128) * 128                  # lane-dense flat spatial axis

    # FiLM projections hoisted to XLA (tiny matmuls), shaped (B, C, 1).
    gamma = (t @ p["wg"].T + p["bg"])[:, :, None]
    beta = (t @ p["wb"].T + p["bb"])[:, :, None]

    xf = x.reshape(B, C, HW)                         # free: HW is contiguous in NCHW
    if HWp != HW:
        # TODO(synk): only when HW is not 128-aligned; padded columns are masked
        # out of the conv and sliced off below.
        xf = jnp.pad(xf, ((0, 0), (0, 0), (0, HWp - HW)))

    pos = jnp.arange(HWp, dtype=jnp.int32)
    row = (pos // W).reshape(1, HWp)                 # precomputed: no int div/mod in-kernel
    col = (pos % W).reshape(1, HWp)

    dw_w = p["dw_w"].reshape(C, 49)
    dw_b = p["dw_b"].reshape(C, 1)
    w1 = p["w1"].astype(jnp.bfloat16)                # bf16 MXU operands
    w2 = p["w2"].astype(jnp.bfloat16)
    b1 = p["b1"].reshape(Dh, 1).astype(jnp.float32)
    b2 = p["b2"].reshape(C, 1).astype(jnp.float32)

    # VMEM accounting (review fix): x/out blocks double-buffered, f32 working
    # copies (~4 C-rows), the (Dh, HWp) GELU intermediate, resident weights.
    itemsize = jnp.dtype(x.dtype).itemsize
    est = (4 * HWp * (4 * C + 2 * Dh)                # f32 intermediates
           + 2 * 2 * HWp * C * itemsize              # in + out, double-buffered
           + 4 * (49 * C + 2 * C * Dh + 2 * C + Dh)  # weights (conservative: f32, x2 buf)
           + (1 << 20))                              # headroom
    cap = _vmem_capacity_bytes()
    vmem_limit = int(min(max(32 << 20, 2 * est), int(0.75 * cap)))
    # TODO(synk): very large C*H*W needs an HW-banded (halo) variant; this
    # whole-image-per-step kernel targets typical diffusion / ConvNeXt tiles.
    assert est <= vmem_limit, (est, vmem_limit)

    kernel = functools.partial(_fused_kernel, H=H, W=W, eps=eps,
                               roll_is_numpy=_roll_matches_numpy())
    const2 = lambda b: (0, 0)

    out = pl.pallas_call(
        kernel,
        out_shape=jax.ShapeDtypeStruct((B, C, HWp), x.dtype),
        grid_spec=pltpu.PrefetchScalarGridSpec(
            num_scalar_prefetch=0,
            grid=(B,),
            in_specs=[
                pl.BlockSpec((1, C, HWp), lambda b: (b, 0, 0)),   # x (flat, lane-dense)
                pl.BlockSpec((1, HWp), const2),                   # row index
                pl.BlockSpec((1, HWp), const2),                   # col index
                # NOTE: the weight blocks below have constant index maps; on
                # v7x they could additionally be single-buffered via
                # pipeline_mode=pl.Buffered(1) to save VMEM at large C.
                pl.BlockSpec((C, 49), const2),                    # dw weights
                pl.BlockSpec((C, 1), const2),                     # dw bias
                pl.BlockSpec((1, C, 1), lambda b: (b, 0, 0)),     # gamma
                pl.BlockSpec((1, C, 1), lambda b: (b, 0, 0)),     # beta
                pl.BlockSpec((Dh, C), const2),                    # w1 (bf16)
                pl.BlockSpec((Dh, 1), const2),                    # b1
                pl.BlockSpec((C, Dh), const2),                    # w2 (bf16)
                pl.BlockSpec((C, 1), const2),                     # b2
            ],
            out_specs=pl.BlockSpec((1, C, HWp), lambda b: (b, 0, 0)),
        ),
        input_output_aliases={0: 0},                 # reuse x's HBM buffer for out
        compiler_params=pltpu.CompilerParams(
            dimension_semantics=("parallel",),       # B>=2 keeps both v7x cores busy
            vmem_limit_bytes=vmem_limit,
        ),
    )(xf, row, col, dw_w, dw_b, gamma, beta, w1, b1, w2, b2)

    if HWp != HW:
        out = out[:, :, :HW]
    return out.reshape(B, C, H, W)


# -----------------------------------------------------------------------------
# Pure-JAX reference (mirrors the PyTorch module).
# -----------------------------------------------------------------------------
def convnext_film_block_reference(x, t, p, *, eps=1e-6):
    B, C, H, W = x.shape
    y = jax.lax.conv_general_dilated(
        x, p["dw_w"][:, None, :, :], (1, 1), ((3, 3), (3, 3)),
        dimension_numbers=("NCHW", "OIHW", "NCHW"),
        feature_group_count=C) + p["dw_b"][None, :, None, None]
    g = (t @ p["wg"].T + p["bg"])[:, :, None, None]
    b = (t @ p["wb"].T + p["bb"])[:, :, None, None]
    mean = y.mean(axis=1, keepdims=True)
    var = ((y - mean) ** 2).mean(axis=1, keepdims=True)
    h = g * (y - mean) / jnp.sqrt(var + eps) + b
    h = jnp.einsum("oc,bchw->bohw", p["w1"], h) + p["b1"][None, :, None, None]
    h = _gelu_tanh(h)
    h = jnp.einsum("co,bohw->bchw", p["w2"], h) + p["b2"][None, :, None, None]
    return x + h


if __name__ == "__main__":
    B, C, H, W = 2, 4, 16, 16          # d_model = 4
    d_t, d_hidden = 8, 16              # d_hidden = 4 * d_model

    key = jax.random.PRNGKey(0)
    ks = jax.random.split(key, 12)

    def u(k, shape, bound):
        return jax.random.uniform(k, shape, jnp.float32, -bound, bound)

    x = jax.random.normal(ks[0], (B, C, H, W), dtype=jnp.float32)
    t = jax.random.normal(ks[1], (B, d_t), dtype=jnp.float32)

    bd = 1.0 / math.sqrt(7 * 7)        # dwconv fan_in = 1*7*7
    bt = 1.0 / math.sqrt(d_t)          # gamma/beta Linear fan_in
    bp1 = 1.0 / math.sqrt(C)           # pw conv1 fan_in
    bp2 = 1.0 / math.sqrt(d_hidden)    # pw conv2 fan_in

    params = dict(
        dw_w=u(ks[2], (C, 7, 7), bd), dw_b=u(ks[3], (C,), bd),
        wg=u(ks[4], (C, d_t), bt), bg=u(ks[5], (C,), bt),
        wb=u(ks[6], (C, d_t), bt), bb=u(ks[7], (C,), bt),
        w1=u(ks[8], (d_hidden, C), bp1), b1=u(ks[9], (d_hidden,), bp1),
        w2=u(ks[10], (C, d_hidden), bp2), b2=u(ks[11], (C,), bp2),
    )

    ref = convnext_film_block_reference(x, t, params)

    out = convnext_film_block(x, t, params)
    out = jax.block_until_ready(out)

    assert out.shape == (B, C, H, W)
    # Tolerance covers the explicit bf16 MXU operands in the fused kernel vs.
    # the f32 XLA reference.
    err = float(jnp.max(jnp.abs(out - ref)))
    assert jnp.allclose(out, ref, atol=2e-2, rtol=2e-2), err

    print("KERNEL_OK")
</pallas_src>

<mosaic_0001>
module attributes {stable_mosaic.version = 11 : i64} {
  func.func @k(%arg0: memref<8x128xf32, #tpu.memory_space<vmem>>, %arg1: memref<8x128xf32, #tpu.memory_space<vmem>>) attributes {dimension_semantics = [], scalar_prefetch = 0 : i64, scratch_operands = 0 : i64, tpu.core_type = #tpu.core_type<tc>} {
    %c0 = arith.constant 0 : index
    %c0_0 = arith.constant 0 : index
    %0 = vector.load %arg0[%c0, %c0_0] : memref<8x128xf32, #tpu.memory_space<vmem>>, vector<8x128xf32>
    %c1_i32 = arith.constant 1 : i32
    %1 = tpu.dynamic_rotate %0 by %c1_i32 dim 1 : vector<8x128xf32>, i32 -> vector<8x128xf32>
    %c0_1 = arith.constant 0 : index
    %c0_2 = arith.constant 0 : index
    %2 = vector.load %arg1[%c0_1, %c0_2] : memref<8x128xf32, #tpu.memory_space<vmem>>, vector<8x128xf32>
    tpu.vector_store %arg1[%c0_1, %c0_2], %1 {strides = array<i32>} : memref<8x128xf32, #tpu.memory_space<vmem>>, vector<8x128xf32>,
    return
  }
}

</mosaic_0001>

<llo_original>
// kernel: tpu_custom_call.1
$region0: #{tpu_custom_call.1}
  #allocation0 [shape = 'u32[]', space=smem, size = 0x4, offset = 0x4, fixed_abs, tag = 'smem constant byte address 0x4 - core index']
  #allocation1 [shape = 'u32[144,128]{1,0:T(1,128)}', space=vmem, size = 0x12000, scoped, tag = 'internal scratch']
  %s0 = inlined_call_operand.hbm [shape: f32[8,128], index: 0, kind: input, shape index: {}]
  %s1 = inlined_call_operand.hbm [shape: f32[8,128], index: 1, kind: output, shape index: {}]
  %s2 = sld [smem:[#allocation0]]
  $region18: #{tpu_custom_call.1} parent=0
    _
  %s4 = ssub.s32 1, %s2
  %s5 = scalar_select 0, %s4, %s2
  $region1: #{tpu_custom_call.1} parent=0
    #allocation2 [shape = 'u8[4096]{0}', space=vmem, size = 0x1000, scoped, tag = 'input window, operand 0, single buffered']
    #allocation3 [shape = 's32[1]{0}', space=sflag, size = 0x4, scoped, tag = 'scoped memory for tpu_custom_call.1']
    #allocation4 [shape = 's32[1]{0}', space=sflag, size = 0x4, scoped, tag = 'scoped memory for tpu_custom_call.1']
    #allocation5 [shape = 'u8[4096]{0}', space=vmem, size = 0x1000, scoped, tag = 'output window, operand 0, single buffered']
    %6 = vsyncpa [#allocation3], 0
    %7 = vsyncpa [#allocation4], 0
    // Predicated region
    $region2: #{tpu_custom_call.1} parent=1 // pred_check
      _
    $region3: #{tpu_custom_call.1} parent=1 // pred_check_branch
      %9 = sbr.rel (0) target = $region5
    $region4: #{tpu_custom_call.1} parent=1 // pred_region
      %s11 = ssub.s32 128, 128
      %12 = vsyncadd [#allocation3], %s11
      %s14 = sshll.u32 [#allocation2], 4
      %s15 = int_to_ptr.vmem [resolvable:$true] %s14
      %17 = dma.hbm_to_vmem [thread:$0]  %s0, 128, %s15, [#allocation3]
    $region5: #{tpu_custom_call.1} parent=1 // pred_fallthru
      _
    // Predicated region
    $region6: #{tpu_custom_call.1} parent=1 // pred_check
      _
    $region7: #{tpu_custom_call.1} parent=1 // pred_check_branch
      %19 = sbr.rel (0) target = $region9
    $region8: #{tpu_custom_call.1} parent=1 // pred_region
      %20 = dma.done [#allocation3], 128
    $region9: #{tpu_custom_call.1} parent=1 // pred_fallthru
      _
    %v21 = vld [vmem:[#allocation2] sm:$0xff]
    %22 = vrot.lane.b32.xlu0 %v21, 1
    %v23 = vpop.permute.xlu0 %22
    %24 = vst [vmem:[#allocation5] sm:$0xff] %v23
    // Predicated region
    $region10: #{tpu_custom_call.1} parent=1 // pred_check
      _
    $region11: #{tpu_custom_call.1} parent=1 // pred_check_branch
      %26 = sbr.rel (0) target = $region13
    $region12: #{tpu_custom_call.1} parent=1 // pred_region
      %s28 = ssub.s32 128, 128
      %29 = vsyncadd [#allocation4], %s28
      %s31 = sshll.u32 [#allocation5], 4
      %s32 = int_to_ptr.vmem [resolvable:$true] %s31
      %34 = dma.vmem_to_hbm [thread:$0]  %s32, 128, %s1, [#allocation4]
    $region13: #{tpu_custom_call.1} parent=1 // pred_fallthru
      _
    // Predicated region
    $region14: #{tpu_custom_call.1} parent=1 // pred_check
      _
    $region15: #{tpu_custom_call.1} parent=1 // pred_check_branch
      %36 = sbr.rel (0) target = $region17
    $region16: #{tpu_custom_call.1} parent=1 // pred_region
      %37 = dma.done [#allocation4], 128
    $region17: #{tpu_custom_call.1} parent=1 // pred_fallthru
      _
    %38 = vsyncpa [#allocation3], 1
    %39 = vsyncpa [#allocation4], 1

</llo_original>
